<compile_context>
chip_gen: v7x
topology: tpu7x:2x2x1
jax: 0.10.0
libtpu: 0.0.40
codegen_flags: <defaults>
</compile_context>

<pallas_src>
import functools

import jax
import jax.numpy as jnp
from jax.experimental import pallas as pl
from jax.experimental.pallas import tpu as pltpu


def _round_up(x, m):
    return (x + m - 1) // m * m


# ---------------------------------------------------------------------------
# Kernel 1: projection.  Wh = h @ W ;  f = Wh @ [a1 | a2]  (one fused matmul)
# ---------------------------------------------------------------------------
def _proj_kernel(h_ref, w_ref, a12_ref, wh_ref, f_ref):
    wh = jnp.dot(h_ref[...], w_ref[...], preferred_element_type=jnp.float32)
    f_ref[...] = jnp.dot(wh.astype(a12_ref.dtype), a12_ref[...],
                         preferred_element_type=jnp.float32)
    wh_ref[...] = wh.astype(wh_ref.dtype)


# ---------------------------------------------------------------------------
# Kernel 2: attention over one tile of query rows vs. all keys.
# ---------------------------------------------------------------------------
def _attn_kernel(adj_ref, f1_ref, f2_ref, wh_ref, o_ref, *,
                 alpha, concat, n_valid, approx_recip):
    f1 = f1_ref[...]                    # (TQ, 1)  query-side scores
    f2 = f2_ref[...]                    # (1, Np)  key-side scores (lane-major)
    e = f1 + f2                         # (TQ, Np) broadcast add, no transpose
    e = jnp.where(e > 0.0, e, alpha * e)            # LeakyReLU(alpha)

    # int8 mask compared directly (no widening cast on the O(N^2) operand).
    masked = jnp.where(adj_ref[...] > 0, e, jnp.float32(-9.0e15))
    if n_valid is not None:
        # Exclude zero-padded key columns so padded lanes contribute exactly 0.
        col = jax.lax.broadcasted_iota(jnp.int32, masked.shape, 1)
        masked = jnp.where(col < n_valid, masked, jnp.float32(-3.0e38))

    m = jnp.max(masked, axis=1, keepdims=True)
    p = jnp.exp(masked - m)
    denom = jnp.sum(p, axis=1, keepdims=True)
    attention = p * pl.reciprocal(denom, approx=approx_recip)

    wh = wh_ref[...]                                 # (Np, Dp), resident
    h_prime = jnp.dot(attention.astype(wh.dtype), wh,
                      preferred_element_type=jnp.float32)
    if concat:
        # ELU (alpha=1): expm1 on a clamped arg; dead branch cannot overflow.
        out = jnp.where(h_prime > 0.0,
                        h_prime,
                        jnp.expm1(jnp.minimum(h_prime, 0.0)))
    else:
        out = h_prime
    o_ref[...] = out.astype(o_ref.dtype)


# ---------------------------------------------------------------------------
# Wrapper
# ---------------------------------------------------------------------------
def gat_forward(h, adj, W, a, *, alpha=0.2, concat=True, tq=128, use_bf16=True):
    """GAT layer forward.  h: (N, in_dim), adj: (N, N), W: (in_dim, out_dim),
    a: (2*out_dim, 1).  Returns (N, out_dim) float32.

    tq: query-row tile (re-derive for v7x's 64 MiB VMEM if you grow it).
    use_bf16: bf16 MXU inputs with f32 accumulation (default); False = exact f32.
    """
    N, in_dim = h.shape
    out_dim = W.shape[1]
    assert a.shape == (2 * out_dim, 1)
    assert tq % 8 == 0

    LANE = 128
    np_ = _round_up(N, max(tq, LANE))          # rows & key-lane dim of adj/e
    dp = _round_up(out_dim, LANE)              # lane-dense output slab
    cdt = jnp.bfloat16 if use_bf16 else jnp.float32

    # Zero-pad to lane-aligned shapes (sliced back off at the end).
    h_p = jnp.zeros((np_, in_dim), cdt).at[:N, :].set(h.astype(cdt))
    w_p = jnp.zeros((in_dim, dp), cdt).at[:, :out_dim].set(W.astype(cdt))
    a12 = jnp.zeros((dp, 2), cdt)
    a12 = a12.at[:out_dim, 0].set(a[:out_dim, 0].astype(cdt))
    a12 = a12.at[:out_dim, 1].set(a[out_dim:, 0].astype(cdt))
    # adj carried as an int8 mask: 4x less HBM traffic on the O(N^2) operand.
    adj_p = jnp.zeros((np_, np_), jnp.int8).at[:N, :N].set(
        (adj > 0).astype(jnp.int8))

    grid = (np_ // tq,)
    params = pltpu.CompilerParams(dimension_semantics=("parallel",),
                                  vmem_limit_bytes=64 << 20)

    wh, f = pl.pallas_call(
        _proj_kernel,
        out_shape=(jax.ShapeDtypeStruct((np_, dp), cdt),
                   jax.ShapeDtypeStruct((np_, 2), jnp.float32)),
        grid=grid,
        in_specs=[pl.BlockSpec((tq, in_dim), lambda i: (i, 0)),   # h tile
                  pl.BlockSpec((in_dim, dp), lambda i: (0, 0)),   # W (resident)
                  pl.BlockSpec((dp, 2), lambda i: (0, 0))],       # [a1|a2]
        out_specs=(pl.BlockSpec((tq, dp), lambda i: (i, 0)),      # Wh tile
                   pl.BlockSpec((tq, 2), lambda i: (i, 0))),      # f tile
        compiler_params=params,
    )(h_p, w_p, a12)

    f1 = f[:, 0:1]                        # (Np, 1)  query-side scores
    f2_row = f[:, 1].reshape(1, np_)      # (1, Np)  key-side scores, lane-major

    attn_kernel = functools.partial(
        _attn_kernel, alpha=float(alpha), concat=concat,
        n_valid=(N if np_ != N else None), approx_recip=use_bf16)

    out_p = pl.pallas_call(
        attn_kernel,
        out_shape=jax.ShapeDtypeStruct((np_, dp), jnp.float32),
        grid=grid,
        in_specs=[pl.BlockSpec((tq, np_), lambda i: (i, 0)),      # adj tile (int8)
                  pl.BlockSpec((tq, 1), lambda i: (i, 0)),        # f1 tile
                  pl.BlockSpec((1, np_), lambda i: (0, 0)),       # f2 row (resident)
                  pl.BlockSpec((np_, dp), lambda i: (0, 0))],     # Wh (resident)
        out_specs=pl.BlockSpec((tq, dp), lambda i: (i, 0)),
        compiler_params=params,
    )(adj_p, f1, f2_row, wh)

    return out_p[:N, :out_dim]


# ---------------------------------------------------------------------------
# Reference + self-test
# ---------------------------------------------------------------------------
def _xavier_uniform(key, shape, gain):
    fan_in, fan_out = shape
    bound = gain * jnp.sqrt(6.0 / (fan_in + fan_out))
    return jax.random.uniform(key, shape, jnp.float32, minval=-bound, maxval=bound)


def _reference_gat(h, adj, W, a, alpha, concat):
    """Pure-JAX f32 reference mirroring the PyTorch forward (eval / dropout=0)."""
    Wh = h @ W
    out_dim = W.shape[1]
    f1 = Wh @ a[:out_dim, :]
    f2 = Wh @ a[out_dim:, :]
    e = f1 + f2.T
    e = jnp.where(e > 0, e, alpha * e)
    att = jnp.where(adj > 0, e, -9.0e15 * jnp.ones_like(e))
    att = jax.nn.softmax(att, axis=1)
    h_prime = att @ Wh
    return jax.nn.elu(h_prime) if concat else h_prime


if __name__ == "__main__":
    # Small deterministic setup: N=16 nodes, in_dim=32, out_dim=64.
    N, in_dim, out_dim = 16, 32, 64
    alpha, concat = 0.2, True

    key = jax.random.PRNGKey(0)
    kW, ka, kh, kadj = jax.random.split(key, 4)
    W = _xavier_uniform(kW, (in_dim, out_dim), gain=1.414)
    a = _xavier_uniform(ka, (2 * out_dim, 1), gain=1.414)
    h = jax.random.normal(kh, (N, in_dim), dtype=jnp.float32)

    # random binary adjacency with self loops
    adj = (jax.random.uniform(kadj, (N, N)) > 0.5).astype(jnp.float32)
    adj = jnp.maximum(adj, jnp.eye(N, dtype=jnp.float32))

    ref = _reference_gat(h, adj, W, a, alpha, concat)

    # Exact path: f32 MXU inputs, exact reciprocal.
    out_f32 = jax.block_until_ready(
        gat_forward(h, adj, W, a, alpha=alpha, concat=concat, use_bf16=False))
    assert out_f32.shape == (N, out_dim)
    assert jnp.allclose(out_f32, ref, atol=1e-4, rtol=1e-4), "f32 mismatch vs reference"

    # Fast path (default): bf16 MXU inputs, f32 accumulation, approx reciprocal.
    # bf16 input rounding bounds relative error around ~1e-2 vs f32 reference.
    out_bf16 = jax.block_until_ready(
        gat_forward(h, adj, W, a, alpha=alpha, concat=concat, use_bf16=True))
    assert out_bf16.shape == (N, out_dim)
    assert jnp.allclose(out_bf16, ref, atol=5e-2, rtol=5e-2), "bf16 mismatch vs reference"

    print("KERNEL_OK")
</pallas_src>

<mosaic_0001>
module attributes {stable_mosaic.version = 11 : i64} {
  func.func @_proj_kernel(%arg0: i32, %arg1: memref<128x32xf32, #tpu.memory_space<vmem>>, %arg2: memref<32x128xf32, #tpu.memory_space<vmem>>, %arg3: memref<128x2xf32, #tpu.memory_space<vmem>>, %arg4: memref<128x128xf32, #tpu.memory_space<vmem>>, %arg5: memref<128x2xf32, #tpu.memory_space<vmem>>) attributes {dimension_semantics = [#tpu.dimension_semantics<parallel>], iteration_bounds = array<i64: 1>, scalar_prefetch = 0 : i64, scratch_operands = 0 : i64, tpu.core_type = #tpu.core_type<tc>, window_params = [{transform_indices = @transform_0, window_bounds = array<i64: 128, 32>}, {pipeline_mode = #tpu.pipeline_mode<synchronous>, transform_indices = @transform_1, window_bounds = array<i64: 32, 128>}, {pipeline_mode = #tpu.pipeline_mode<synchronous>, transform_indices = @transform_2, window_bounds = array<i64: 128, 2>}, {transform_indices = @transform_3, window_bounds = array<i64: 128, 128>}, {transform_indices = @transform_4, window_bounds = array<i64: 128, 2>}]} {
    %c0 = arith.constant 0 : index
    %c0_0 = arith.constant 0 : index
    %0 = vector.load %arg1[%c0, %c0_0] : memref<128x32xf32, #tpu.memory_space<vmem>>, vector<128x32xf32>
    %c0_1 = arith.constant 0 : index
    %c0_2 = arith.constant 0 : index
    %1 = vector.load %arg2[%c0_1, %c0_2] : memref<32x128xf32, #tpu.memory_space<vmem>>, vector<32x128xf32>
    %cst = arith.constant dense<0.000000e+00> : vector<128x128xf32>
    %2 = tpu.matmul %0, %1, %cst {dimension_numbers = #tpu.dot_dimension_numbers<[1], [0], [0], [1], [0, 0, 1, 1], [], []>} : vector<128x32xf32>, vector<32x128xf32>, vector<128x128xf32> -> vector<128x128xf32>
    %c0_3 = arith.constant 0 : index
    %c0_4 = arith.constant 0 : index
    %3 = vector.load %arg3[%c0_3, %c0_4] : memref<128x2xf32, #tpu.memory_space<vmem>>, vector<128x2xf32>
    %cst_5 = arith.constant dense<0.000000e+00> : vector<128x2xf32>
    %4 = tpu.matmul %2, %3, %cst_5 {dimension_numbers = #tpu.dot_dimension_numbers<[1], [0], [0], [1], [0, 0, 1, 1], [], []>} : vector<128x128xf32>, vector<128x2xf32>, vector<128x2xf32> -> vector<128x2xf32>
    %c0_6 = arith.constant 0 : index
    %c0_7 = arith.constant 0 : index
    %5 = vector.load %arg5[%c0_6, %c0_7] : memref<128x2xf32, #tpu.memory_space<vmem>>, vector<128x2xf32>
    tpu.vector_store %arg5[%c0_6, %c0_7], %4 {strides = array<i32>} : memref<128x2xf32, #tpu.memory_space<vmem>>, vector<128x2xf32>,
    %c0_8 = arith.constant 0 : index
    %c0_9 = arith.constant 0 : index
    %6 = vector.load %arg4[%c0_8, %c0_9] : memref<128x128xf32, #tpu.memory_space<vmem>>, vector<128x128xf32>
    tpu.vector_store %arg4[%c0_8, %c0_9], %2 {strides = array<i32>} : memref<128x128xf32, #tpu.memory_space<vmem>>, vector<128x128xf32>,
    return
  }
  func.func @transform_0(%arg0: i32) -> (i32, i32) {
    %c0_i32 = arith.constant 0 : i32
    %c0_i32_0 = arith.constant 0 : i32
    return %arg0, %c0_i32 : i32, i32
  }
  func.func @transform_1(%arg0: i32) -> (i32, i32) {
    %c0_i32 = arith.constant 0 : i32
    %c0_i32_0 = arith.constant 0 : i32
    %c0_i32_1 = arith.constant 0 : i32
    return %c0_i32, %c0_i32_0 : i32, i32
  }
  func.func @transform_2(%arg0: i32) -> (i32, i32) {
    %c0_i32 = arith.constant 0 : i32
    %c0_i32_0 = arith.constant 0 : i32
    %c0_i32_1 = arith.constant 0 : i32
    return %c0_i32, %c0_i32_0 : i32, i32
  }
  func.func @transform_3(%arg0: i32) -> (i32, i32) {
    %c0_i32 = arith.constant 0 : i32
    %c0_i32_0 = arith.constant 0 : i32
    return %arg0, %c0_i32 : i32, i32
  }
  func.func @transform_4(%arg0: i32) -> (i32, i32) {
    %c0_i32 = arith.constant 0 : i32
    %c0_i32_0 = arith.constant 0 : i32
    return %arg0, %c0_i32 : i32, i32
  }
}

</mosaic_0001>

<llo_original>
// kernel: tpu_custom_call.1
$region0: #{tpu_custom_call.1}
  #allocation0 [shape = 'u32[]', space=smem, size = 0x4, offset = 0x4, fixed_abs, tag = 'smem constant byte address 0x4 - core index']
  #allocation1 [shape = 'u32[144,128]{1,0:T(1,128)}', space=vmem, size = 0x12000, scoped, tag = 'internal scratch']
  %s0 = inlined_call_operand.hbm [shape: f32[128,32], index: 0, kind: input, shape index: {}]
  %s1 = inlined_call_operand.hbm [shape: f32[32,128], index: 1, kind: input, shape index: {}]
  %s2 = inlined_call_operand.hbm [shape: f32[128,2], index: 2, kind: input, shape index: {}]
  %s3 = inlined_call_operand.hbm [shape: f32[128,128], index: 3, kind: output, shape index: {0}]
  %s4 = inlined_call_operand.hbm [shape: f32[128,2], index: 4, kind: output, shape index: {1}]
  %5 = xla_tuple %s3, %s4
  %s6 = sld [smem:[#allocation0]]
  $region42: #{tpu_custom_call.1} parent=0
    _
  %s8 = ssub.s32 1, %s6
  %s9 = scalar_select 0, %s8, %s6
  $region1: #{tpu_custom_call.1} parent=0
    #allocation2 [shape = 'u8[65536]{0}', space=vmem, size = 0x10000, scoped, tag = 'input window, operand 0, single buffered']
    #allocation3 [shape = 's32[1]{0}', space=sflag, size = 0x4, scoped, tag = 'scoped memory for tpu_custom_call.1']
    #allocation4 [shape = 's32[1]{0}', space=sflag, size = 0x4, scoped, tag = 'scoped memory for tpu_custom_call.1']
    #allocation5 [shape = 'u8[16384]{0}', space=vmem, size = 0x4000, scoped, tag = 'input window, operand 1, single buffered']
    #allocation6 [shape = 's32[1]{0}', space=sflag, size = 0x4, scoped, tag = 'scoped memory for tpu_custom_call.1']
    #allocation7 [shape = 'u8[65536]{0}', space=vmem, size = 0x10000, scoped, tag = 'input window, operand 2, single buffered']
    #allocation8 [shape = 'u8[65536]{0}', space=vmem, size = 0x10000, scoped, tag = 'output window, operand 0, single buffered']
    #allocation9 [shape = 'u8[65536]{0}', space=vmem, size = 0x10000, scoped, tag = 'output window, operand 1, single buffered']
    #allocation10 [shape = 's32[1]{0}', space=sflag, size = 0x4, scoped, tag = 'scoped memory for tpu_custom_call.1']
    %10 = vsyncpa [#allocation3], 0
    %11 = vsyncpa [#allocation6], 0
    %12 = vsyncpa [#allocation4], 0
    %13 = vsyncpa [#allocation10], 0
    // Predicated region
    $region2: #{tpu_custom_call.1} parent=1 // pred_check
      _
    $region3: #{tpu_custom_call.1} parent=1 // pred_check_branch
      %15 = sbr.rel (0) target = $region5
    $region4: #{tpu_custom_call.1} parent=1 // pred_region
      %s17 = ssub.s32 2048, 2048
      %18 = vsyncadd [#allocation3], %s17
      %s19 = sshll.u32 [#allocation2], 4
      %s20 = int_to_ptr.vmem [resolvable:$true] %s19
      %25 = dma.hbm_to_vmem [thread:$0]  %s0, 2048, %s20, [#allocation3], 128, 128, 8
    $region5: #{tpu_custom_call.1} parent=1 // pred_fallthru
      _
    // Predicated region
    $region6: #{tpu_custom_call.1} parent=1 // pred_check
      _
    $region7: #{tpu_custom_call.1} parent=1 // pred_check_branch
      %27 = sbr.rel (0) target = $region9
    $region8: #{tpu_custom_call.1} parent=1 // pred_region
      %s29 = ssub.s32 512, 512
      %30 = vsyncadd [#allocation6], %s29
      %s31 = sshll.u32 [#allocation5], 4
      %s32 = int_to_ptr.vmem [resolvable:$true] %s31
      %37 = dma.hbm_to_vmem [thread:$0]  %s1, 512, %s32, [#allocation6], 128, 128, 8
    $region9: #{tpu_custom_call.1} parent=1 // pred_fallthru
      _
    // Predicated region
    $region10: #{tpu_custom_call.1} parent=1 // pred_check
      _
    $region11: #{tpu_custom_call.1} parent=1 // pred_check_branch
      %39 = sbr.rel (0) target = $region13
    $region12: #{tpu_custom_call.1} parent=1 // pred_region
      %s41 = ssub.s32 2048, 2048
      %42 = vsyncadd [#allocation6], %s41
      %s43 = sshll.u32 [#allocation7], 4
      %s44 = int_to_ptr.vmem [resolvable:$true] %s43
      %49 = dma.hbm_to_vmem [thread:$0]  %s2, 2048, %s44, [#allocation6], 128, 128, 8
    $region13: #{tpu_custom_call.1} parent=1 // pred_fallthru
      _
    // Predicated region
    $region14: #{tpu_custom_call.1} parent=1 // pred_check
      _
    $region15: #{tpu_custom_call.1} parent=1 // pred_check_branch
      %51 = sbr.rel (0) target = $region17
    $region16: #{tpu_custom_call.1} parent=1 // pred_region
      %52 = dma.done [#allocation3], 2048
    $region17: #{tpu_custom_call.1} parent=1 // pred_fallthru
      _
    // Predicated region
    $region18: #{tpu_custom_call.1} parent=1 // pred_check
      _
    $region19: #{tpu_custom_call.1} parent=1 // pred_check_branch
      %54 = sbr.rel (0) target = $region21
    $region20: #{tpu_custom_call.1} parent=1 // pred_region
      %55 = dma.done [#allocation6], 512
    $region21: #{tpu_custom_call.1} parent=1 // pred_fallthru
      _
    // Predicated region
    $region22: #{tpu_custom_call.1} parent=1 // pred_check
      _
    $region23: #{tpu_custom_call.1} parent=1 // pred_check_branch
      %57 = sbr.rel (0) target = $region25
    $region24: #{tpu_custom_call.1} parent=1 // pred_region
      %58 = dma.done [#allocation6], 2048
    $region25: #{tpu_custom_call.1} parent=1 // pred_fallthru
      _
    %v59 = vld [vmem:[#allocation2] sm:$0xff]
    %v60 = vld [vmem:[#allocation2 + $0x8] sm:$0xff]
    %v61 = vld [vmem:[#allocation2 + $0x10] sm:$0xff]
    %v62 = vld [vmem:[#allocation2 + $0x18] sm:$0xff]
    %v63 = vld [vmem:[#allocation2 + $0x20] sm:$0xff]
    %v64 = vld [vmem:[#allocation2 + $0x28] sm:$0xff]
    %v65 = vld [vmem:[#allocation2 + $0x30] sm:$0xff]
    %v66 = vld [vmem:[#allocation2 + $0x38] sm:$0xff]
    %v67 = vld [vmem:[#allocation2 + $0x40] sm:$0xff]
    %v68 = vld [vmem:[#allocation2 + $0x48] sm:$0xff]
    %v69 = vld [vmem:[#allocation2 + $0x50] sm:$0xff]
    %v70 = vld [vmem:[#allocation2 + $0x58] sm:$0xff]
    %v71 = vld [vmem:[#allocation2 + $0x60] sm:$0xff]
    %v72 = vld [vmem:[#allocation2 + $0x68] sm:$0xff]
    %v73 = vld [vmem:[#allocation2 + $0x70] sm:$0xff]
    %v74 = vld [vmem:[#allocation2 + $0x78] sm:$0xff]
    %v75 = vld [vmem:[#allocation5] sm:$0xff]
    %v76 = vld [vmem:[#allocation5 + $0x8] sm:$0xff]
    %v77 = vld [vmem:[#allocation5 + $0x10] sm:$0xff]
    %v78 = vld [vmem:[#allocation5 + $0x18] sm:$0xff]
    %vm79 = vcmask 261120
    %v81 = vsel %vm79, %v59, 0
    %v84 = vsel %vm79, %v60, 0
    %v87 = vsel %vm79, %v61, 0
    %v90 = vsel %vm79, %v62, 0
    %v93 = vsel %vm79, %v63, 0
    %v96 = vsel %vm79, %v64, 0
    %v99 = vsel %vm79, %v65, 0
    %v102 = vsel %vm79, %v66, 0
    %v105 = vsel %vm79, %v67, 0
    %v108 = vsel %vm79, %v68, 0
    %v111 = vsel %vm79, %v69, 0
    %v114 = vsel %vm79, %v70, 0
    %v117 = vsel %vm79, %v71, 0
    %v120 = vsel %vm79, %v72, 0
    %v123 = vsel %vm79, %v73, 0
    %v126 = vsel %vm79, %v74, 0
    %128 = vmatprep.subr.mxu0 0.0
    %129 = vmatpush1.msra.mxu0 %v75
    %130 = vmatprep.subr.mxu0 0.0
    %131 = vmatpush1.msra.mxu0 %v76
    %132 = vmatprep.subr.mxu0 0.0
    %133 = vmatpush1.msra.mxu0 %v77
    %134 = vmatprep.subr.mxu0 0.0
    %135 = vmatpush1.msra.mxu0 %v78
    %136 = vmatprep.subr.mxu0 0.0
    %137 = vmatpush1.msra.mxu0 0.0
    %138 = vmatprep.subr.mxu0 0.0
    %139 = vmatpush1.msra.mxu0 0.0
    %140 = vmatprep.subr.mxu0 0.0
    %141 = vmatpush1.msra.mxu0 0.0
    %142 = vmatprep.subr.mxu0 0.0
    %143 = vmatpush1.msra.mxu0 0.0
    %144 = vmatprep.subr.mxu0 0.0
    %145 = vmatpush1.msra.mxu0 0.0
    %146 = vmatprep.subr.mxu0 0.0
    %147 = vmatpush1.msra.mxu0 0.0
    %148 = vmatprep.subr.mxu0 0.0
    %149 = vmatpush1.msra.mxu0 0.0
    %150 = vmatprep.subr.mxu0 0.0
    %151 = vmatpush1.msra.mxu0 0.0
    %152 = vmatprep.subr.mxu0 0.0
    %153 = vmatpush1.msra.mxu0 0.0
    %154 = vmatprep.subr.mxu0 0.0
    %155 = vmatpush1.msra.mxu0 0.0
    %156 = vmatprep.subr.mxu0 0.0
    %157 = vmatpush1.msra.mxu0 0.0
    %158 = vmatprep.subr.mxu0 0.0
    %159 = vmatpush1.msra.mxu0 0.0
    %160 = vmatprep.subr.mxu0 0.0
    %161 = vmatpush1.msra.mxu0 0.0
    %162 = vmatprep.subr.mxu0 0.0
    %163 = vmatpush1.msra.mxu0 0.0
    %164 = vmatprep.subr.mxu0 0.0
    %165 = vmatpush1.msra.mxu0 0.0
    %166 = vmatprep.subr.mxu0 0.0
    %167 = vmatpush1.msra.mxu0 0.0
    %168 = vmatprep.subr.mxu0 0.0
    %169 = vmatpush1.msra.mxu0 0.0
    %170 = vmatprep.subr.mxu0 0.0
    %171 = vmatpush1.msra.mxu0 0.0
    %172 = vmatprep.subr.mxu0 0.0
    %173 = vmatpush1.msra.mxu0 0.0
    %174 = vmatprep.subr.mxu0 0.0
    %175 = vmatpush1.msra.mxu0 0.0
    %176 = vmatprep.subr.mxu0 0.0
    %177 = vmatpush1.msra.mxu0 0.0
    %178 = vmatprep.subr.mxu0 0.0
    %179 = vmatpush1.msra.mxu0 0.0
    %180 = vmatprep.subr.mxu0 0.0
    %181 = vmatpush1.msra.mxu0 0.0
    %182 = vmatprep.subr.mxu0 0.0
    %183 = vmatpush1.msra.mxu0 0.0
    %184 = vmatprep.subr.mxu0 0.0
    %185 = vmatpush1.msra.mxu0 0.0
    %186 = vmatprep.subr.mxu0 0.0
    %187 = vmatpush1.msra.mxu0 0.0
    %188 = vmatprep.subr.mxu0 0.0
    %189 = vmatpush1.msra.mxu0 0.0
    %190 = vmatprep.subr.mxu0 0.0
    %191 = vmatpush1.msra.mxu0 0.0
    %192 = vmatprep.mubr.f32.mxu0 0.0
    %193 = vmatmul.mubr.f32.gmra.mrb[0].mxu0 %v81
    %v194 = vpop.f32.mrb[0].mxu0
    %v195 = vadd.f32 0.0, %v194
    %v196 = vpop.f32.mrb[0].mxu0
    %197 = vmatprep.mubr.f32.mxu0 0.0
    %198 = vmatmul.mubr.f32.gmra.mrb[0].mxu0 %v84
    %v199 = vpop.f32.mrb[0].mxu0
    %v200 = vadd.f32 0.0, %v199
    %v201 = vpop.f32.mrb[0].mxu0
    %202 = vmatprep.mubr.f32.mxu0 0.0
    %203 = vmatmul.mubr.f32.gmra.mrb[0].mxu0 %v87
    %v204 = vpop.f32.mrb[0].mxu0
    %v205 = vadd.f32 0.0, %v204
    %v206 = vpop.f32.mrb[0].mxu0
    %207 = vmatprep.mubr.f32.mxu0 0.0
    %208 = vmatmul.mubr.f32.gmra.mrb[0].mxu0 %v90
    %v209 = vpop.f32.mrb[0].mxu0
    %v210 = vadd.f32 0.0, %v209
    %v211 = vpop.f32.mrb[0].mxu0
    %212 = vmatprep.mubr.f32.mxu0 0.0
    %213 = vmatmul.mubr.f32.gmra.mrb[0].mxu0 %v93
    %v214 = vpop.f32.mrb[0].mxu0
    %v215 = vadd.f32 0.0, %v214
    %v216 = vpop.f32.mrb[0].mxu0
    %217 = vmatprep.mubr.f32.mxu0 0.0
    %218 = vmatmul.mubr.f32.gmra.mrb[0].mxu0 %v96
    %v219 = vpop.f32.mrb[0].mxu0
    %v220 = vadd.f32 0.0, %v219
    %v221 = vpop.f32.mrb[0].mxu0
    %222 = vmatprep.mubr.f32.mxu0 0.0
    %223 = vmatmul.mubr.f32.gmra.mrb[0].mxu0 %v99
    %v224 = vpop.f32.mrb[0].mxu0
    %v225 = vadd.f32 0.0, %v224
    %v226 = vpop.f32.mrb[0].mxu0
    %227 = vmatprep.mubr.f32.mxu0 0.0
    %228 = vmatmul.mubr.f32.gmra.mrb[0].mxu0 %v102
    %v229 = vpop.f32.mrb[0].mxu0
    %v230 = vadd.f32 0.0, %v229
    %v231 = vpop.f32.mrb[0].mxu0
    %232 = vmatprep.mubr.f32.mxu0 0.0
    %233 = vmatmul.mubr.f32.gmra.mrb[0].mxu0 %v105
    %v234 = vpop.f32.mrb[0].mxu0
    %v235 = vadd.f32 0.0, %v234
    %v236 = vpop.f32.mrb[0].mxu0
    %237 = vmatprep.mubr.f32.mxu0 0.0
    %238 = vmatmul.mubr.f32.gmra.mrb[0].mxu0 %v108
    %v239 = vpop.f32.mrb[0].mxu0
    %v240 = vadd.f32 0.0, %v239
    %v241 = vpop.f32.mrb[0].mxu0
    %242 = vmatprep.mubr.f32.mxu0 0.0
    %243 = vmatmul.mubr.f32.gmra.mrb[0].mxu0 %v111
    %v244 = vpop.f32.mrb[0].mxu0
    %v245 = vadd.f32 0.0, %v244
    %v246 = vpop.f32.mrb[0].mxu0
    %247 = vmatprep.mubr.f32.mxu0 0.0
    %248 = vmatmul.mubr.f32.gmra.mrb[0].mxu0 %v114
    %v249 = vpop.f32.mrb[0].mxu0
    %v250 = vadd.f32 0.0, %v249
    %v251 = vpop.f32.mrb[0].mxu0
    %252 = vmatprep.mubr.f32.mxu0 0.0
    %253 = vmatmul.mubr.f32.gmra.mrb[0].mxu0 %v117
    %v254 = vpop.f32.mrb[0].mxu0
    %v255 = vadd.f32 0.0, %v254
    %v256 = vpop.f32.mrb[0].mxu0
    %257 = vmatprep.mubr.f32.mxu0 0.0
    %258 = vmatmul.mubr.f32.gmra.mrb[0].mxu0 %v120
    %v259 = vpop.f32.mrb[0].mxu0
    %v260 = vadd.f32 0.0, %v259
    %v261 = vpop.f32.mrb[0].mxu0
    %262 = vmatprep.mubr.f32.mxu0 0.0
    %263 = vmatmul.mubr.f32.gmra.mrb[0].mxu0 %v123
    %v264 = vpop.f32.mrb[0].mxu0
    %v265 = vadd.f32 0.0, %v264
    %v266 = vpop.f32.mrb[0].mxu0
    %267 = vmatprep.mubr.f32.mxu0 0.0
    %268 = vmatmul.mubr.f32.gmra.mrb[0].mxu0 %v126
    %v269 = vpop.f32.mrb[0].mxu0
    %v270 = vadd.f32 0.0, %v269
    %v271 = vpop.f32.mrb[0].mxu0
    %272 = vdwg.mxu0
    %v273 = vld [vmem:[#allocation7] sm:$0xff]
    %v274 = vld [vmem:[#allocation7 + $0x8] sm:$0xff]
    %v275 = vld [vmem:[#allocation7 + $0x10] sm:$0xff]
    %v276 = vld [vmem:[#allocation7 + $0x18] sm:$0xff]
    %v277 = vld [vmem:[#allocation7 + $0x20] sm:$0xff]
    %v278 = vld [vmem:[#allocation7 + $0x28] sm:$0xff]
    %v279 = vld [vmem:[#allocation7 + $0x30] sm:$0xff]
    %v280 = vld [vmem:[#allocation7 + $0x38] sm:$0xff]
    %v281 = vld [vmem:[#allocation7 + $0x40] sm:$0xff]
    %v282 = vld [vmem:[#allocation7 + $0x48] sm:$0xff]
    %v283 = vld [vmem:[#allocation7 + $0x50] sm:$0xff]
    %v284 = vld [vmem:[#allocation7 + $0x58] sm:$0xff]
    %v285 = vld [vmem:[#allocation7 + $0x60] sm:$0xff]
    %v286 = vld [vmem:[#allocation7 + $0x68] sm:$0xff]
    %v287 = vld [vmem:[#allocation7 + $0x70] sm:$0xff]
    %v288 = vld [vmem:[#allocation7 + $0x78] sm:$0xff]
    %289 = vmatprep.subr.mxu0 0.0
    %290 = vmatpush1.msra.mxu0 %v273
    %291 = vmatprep.subr.mxu0 0.0
    %292 = vmatpush1.msra.mxu0 %v274
    %293 = vmatprep.subr.mxu0 0.0
    %294 = vmatpush1.msra.mxu0 %v275
    %295 = vmatprep.subr.mxu0 0.0
    %296 = vmatpush1.msra.mxu0 %v276
    %297 = vmatprep.subr.mxu0 0.0
    %298 = vmatpush1.msra.mxu0 %v277
    %299 = vmatprep.subr.mxu0 0.0
    %300 = vmatpush1.msra.mxu0 %v278
    %301 = vmatprep.subr.mxu0 0.0
    %302 = vmatpush1.msra.mxu0 %v279
    %303 = vmatprep.subr.mxu0 0.0
    %304 = vmatpush1.msra.mxu0 %v280
    %305 = vmatprep.subr.mxu0 0.0
    %306 = vmatpush1.msra.mxu0 %v281
    %307 = vmatprep.subr.mxu0 0.0
    %308 = vmatpush1.msra.mxu0 %v282
    %309 = vmatprep.subr.mxu0 0.0
    %310 = vmatpush1.msra.mxu0 %v283
    %311 = vmatprep.subr.mxu0 0.0
    %312 = vmatpush1.msra.mxu0 %v284
    %313 = vmatprep.subr.mxu0 0.0
    %314 = vmatpush1.msra.mxu0 %v285
    %315 = vmatprep.subr.mxu0 0.0
    %316 = vmatpush1.msra.mxu0 %v286
    %317 = vmatprep.subr.mxu0 0.0
    %318 = vmatpush1.msra.mxu0 %v287
    %319 = vmatprep.subr.mxu0 0.0
    %320 = vmatpush1.msra.mxu0 %v288
    %321 = vmatprep.subr.mxu0 0.0
    %322 = vmatpush1.msra.mxu0 0.0
    %323 = vmatprep.subr.mxu0 0.0
    %324 = vmatpush1.msra.mxu0 0.0
    %325 = vmatprep.subr.mxu0 0.0
    %326 = vmatpush1.msra.mxu0 0.0
    %327 = vmatprep.subr.mxu0 0.0
    %328 = vmatpush1.msra.mxu0 0.0
    %329 = vmatprep.subr.mxu0 0.0
    %330 = vmatpush1.msra.mxu0 0.0
    %331 = vmatprep.subr.mxu0 0.0
    %332 = vmatpush1.msra.mxu0 0.0
    %333 = vmatprep.subr.mxu0 0.0
    %334 = vmatpush1.msra.mxu0 0.0
    %335 = vmatprep.subr.mxu0 0.0
    %336 = vmatpush1.msra.mxu0 0.0
    %337 = vmatprep.subr.mxu0 0.0
    %338 = vmatpush1.msra.mxu0 0.0
    %339 = vmatprep.subr.mxu0 0.0
    %340 = vmatpush1.msra.mxu0 0.0
    %341 = vmatprep.subr.mxu0 0.0
    %342 = vmatpush1.msra.mxu0 0.0
    %343 = vmatprep.subr.mxu0 0.0
    %344 = vmatpush1.msra.mxu0 0.0
    %345 = vmatprep.subr.mxu0 0.0
    %346 = vmatpush1.msra.mxu0 0.0
    %347 = vmatprep.subr.mxu0 0.0
    %348 = vmatpush1.msra.mxu0 0.0
    %349 = vmatprep.subr.mxu0 0.0
    %350 = vmatpush1.msra.mxu0 0.0
    %351 = vmatprep.subr.mxu0 0.0
    %352 = vmatpush1.msra.mxu0 0.0
    %353 = vmatprep.mubr.f32.mxu0 0.0
    %354 = vmatmul.mubr.f32.gmra.mrb[0].mxu0 %v195
    %v355 = vpop.f32.mrb[0].mxu0
    %v356 = vadd.f32 0.0, %v355
    %v357 = vpop.f32.mrb[0].mxu0
    %358 = vmatprep.mubr.f32.mxu0 0.0
    %359 = vmatmul.mubr.f32.gmra.mrb[0].mxu0 %v200
    %v360 = vpop.f32.mrb[0].mxu0
    %v361 = vadd.f32 0.0, %v360
    %v362 = vpop.f32.mrb[0].mxu0
    %363 = vmatprep.mubr.f32.mxu0 0.0
    %364 = vmatmul.mubr.f32.gmra.mrb[0].mxu0 %v205
    %v365 = vpop.f32.mrb[0].mxu0
    %v366 = vadd.f32 0.0, %v365
    %v367 = vpop.f32.mrb[0].mxu0
    %368 = vmatprep.mubr.f32.mxu0 0.0
    %369 = vmatmul.mubr.f32.gmra.mrb[0].mxu0 %v210
    %v370 = vpop.f32.mrb[0].mxu0
    %v371 = vadd.f32 0.0, %v370
    %v372 = vpop.f32.mrb[0].mxu0
    %373 = vmatprep.mubr.f32.mxu0 0.0
    %374 = vmatmul.mubr.f32.gmra.mrb[0].mxu0 %v215
    %v375 = vpop.f32.mrb[0].mxu0
    %v376 = vadd.f32 0.0, %v375
    %v377 = vpop.f32.mrb[0].mxu0
    %378 = vmatprep.mubr.f32.mxu0 0.0
    %379 = vmatmul.mubr.f32.gmra.mrb[0].mxu0 %v220
    %v380 = vpop.f32.mrb[0].mxu0
    %v381 = vadd.f32 0.0, %v380
    %v382 = vpop.f32.mrb[0].mxu0
    %383 = vmatprep.mubr.f32.mxu0 0.0
    %384 = vmatmul.mubr.f32.gmra.mrb[0].mxu0 %v225
    %v385 = vpop.f32.mrb[0].mxu0
    %v386 = vadd.f32 0.0, %v385
    %v387 = vpop.f32.mrb[0].mxu0
    %388 = vmatprep.mubr.f32.mxu0 0.0
    %389 = vmatmul.mubr.f32.gmra.mrb[0].mxu0 %v230
    %v390 = vpop.f32.mrb[0].mxu0
    %v391 = vadd.f32 0.0, %v390
    %v392 = vpop.f32.mrb[0].mxu0
    %393 = vmatprep.mubr.f32.mxu0 0.0
    %394 = vmatmul.mubr.f32.gmra.mrb[0].mxu0 %v235
    %v395 = vpop.f32.mrb[0].mxu0
    %v396 = vadd.f32 0.0, %v395
    %v397 = vpop.f32.mrb[0].mxu0
    %398 = vmatprep.mubr.f32.mxu0 0.0
    %399 = vmatmul.mubr.f32.gmra.mrb[0].mxu0 %v240
    %v400 = vpop.f32.mrb[0].mxu0
    %v401 = vadd.f32 0.0, %v400
    %v402 = vpop.f32.mrb[0].mxu0
    %403 = vmatprep.mubr.f32.mxu0 0.0
    %404 = vmatmul.mubr.f32.gmra.mrb[0].mxu0 %v245
    %v405 = vpop.f32.mrb[0].mxu0
    %v406 = vadd.f32 0.0, %v405
    %v407 = vpop.f32.mrb[0].mxu0
    %408 = vmatprep.mubr.f32.mxu0 0.0
    %409 = vmatmul.mubr.f32.gmra.mrb[0].mxu0 %v250
    %v410 = vpop.f32.mrb[0].mxu0
    %v411 = vadd.f32 0.0, %v410
    %v412 = vpop.f32.mrb[0].mxu0
    %413 = vmatprep.mubr.f32.mxu0 0.0
    %414 = vmatmul.mubr.f32.gmra.mrb[0].mxu0 %v255
    %v415 = vpop.f32.mrb[0].mxu0
    %v416 = vadd.f32 0.0, %v415
    %v417 = vpop.f32.mrb[0].mxu0
    %418 = vmatprep.mubr.f32.mxu0 0.0
    %419 = vmatmul.mubr.f32.gmra.mrb[0].mxu0 %v260
    %v420 = vpop.f32.mrb[0].mxu0
    %v421 = vadd.f32 0.0, %v420
    %v422 = vpop.f32.mrb[0].mxu0
    %423 = vmatprep.mubr.f32.mxu0 0.0
    %424 = vmatmul.mubr.f32.gmra.mrb[0].mxu0 %v265
    %v425 = vpop.f32.mrb[0].mxu0
    %v426 = vadd.f32 0.0, %v425
    %v427 = vpop.f32.mrb[0].mxu0
    %428 = vmatprep.mubr.f32.mxu0 0.0
    %429 = vmatmul.mubr.f32.gmra.mrb[0].mxu0 %v270
    %v430 = vpop.f32.mrb[0].mxu0
    %v431 = vadd.f32 0.0, %v430
    %v432 = vpop.f32.mrb[0].mxu0
    %433 = vdwg.mxu0
    %vm434 = vcmask 15360
    %435 = vst.msk [vmem:[#allocation9] sm:$0xff] %vm434, %v356
    %436 = vst.msk [vmem:[#allocation9 + $0x8] sm:$0xff] %vm434, %v361
    %437 = vst.msk [vmem:[#allocation9 + $0x10] sm:$0xff] %vm434, %v366
    %438 = vst.msk [vmem:[#allocation9 + $0x18] sm:$0xff] %vm434, %v371
    %439 = vst.msk [vmem:[#allocation9 + $0x20] sm:$0xff] %vm434, %v376
    %440 = vst.msk [vmem:[#allocation9 + $0x28] sm:$0xff] %vm434, %v381
    %441 = vst.msk [vmem:[#allocation9 + $0x30] sm:$0xff] %vm434, %v386
    %442 = vst.msk [vmem:[#allocation9 + $0x38] sm:$0xff] %vm434, %v391
    %443 = vst.msk [vmem:[#allocation9 + $0x40] sm:$0xff] %vm434, %v396
    %444 = vst.msk [vmem:[#allocation9 + $0x48] sm:$0xff] %vm434, %v401
    %445 = vst.msk [vmem:[#allocation9 + $0x50] sm:$0xff] %vm434, %v406
    %446 = vst.msk [vmem:[#allocation9 + $0x58] sm:$0xff] %vm434, %v411
    %447 = vst.msk [vmem:[#allocation9 + $0x60] sm:$0xff] %vm434, %v416
    %448 = vst.msk [vmem:[#allocation9 + $0x68] sm:$0xff] %vm434, %v421
    %449 = vst.msk [vmem:[#allocation9 + $0x70] sm:$0xff] %vm434, %v426
    %450 = vst.msk [vmem:[#allocation9 + $0x78] sm:$0xff] %vm434, %v431
    %451 = vst [vmem:[#allocation8] sm:$0xff] %v195
    %452 = vst [vmem:[#allocation8 + $0x8] sm:$0xff] %v200
    %453 = vst [vmem:[#allocation8 + $0x10] sm:$0xff] %v205
    %454 = vst [vmem:[#allocation8 + $0x18] sm:$0xff] %v210
    %455 = vst [vmem:[#allocation8 + $0x20] sm:$0xff] %v215
    %456 = vst [vmem:[#allocation8 + $0x28] sm:$0xff] %v220
    %457 = vst [vmem:[#allocation8 + $0x30] sm:$0xff] %v225
    %458 = vst [vmem:[#allocation8 + $0x38] sm:$0xff] %v230
    %459 = vst [vmem:[#allocation8 + $0x40] sm:$0xff] %v235
    %460 = vst [vmem:[#allocation8 + $0x48] sm:$0xff] %v240
    %461 = vst [vmem:[#allocation8 + $0x50] sm:$0xff] %v245
    %462 = vst [vmem:[#allocation8 + $0x58] sm:$0xff] %v250
    %463 = vst [vmem:[#allocation8 + $0x60] sm:$0xff] %v255
    %464 = vst [vmem:[#allocation8 + $0x68] sm:$0xff] %v260
    %465 = vst [vmem:[#allocation8 + $0x70] sm:$0xff] %v265
    %466 = vst [vmem:[#allocation8 + $0x78] sm:$0xff] %v270
    // Predicated region
    $region26: #{tpu_custom_call.1} parent=1 // pred_check
      _
    $region27: #{tpu_custom_call.1} parent=1 // pred_check_branch
      %468 = sbr.rel (0) target = $region29
    $region28: #{tpu_custom_call.1} parent=1 // pred_region
      %s470 = ssub.s32 2048, 2048
      %471 = vsyncadd [#allocation4], %s470
      %s472 = sshll.u32 [#allocation8], 4
      %s473 = int_to_ptr.vmem [resolvable:$true] %s472
      %478 = dma.vmem_to_hbm [thread:$0]  %s473, 2048, %s3, [#allocation4], 128, 128, 8
    $region29: #{tpu_custom_call.1} parent=1 // pred_fallthru
      _
    // Predicated region
    $region30: #{tpu_custom_call.1} parent=1 // pred_check
      _
    $region31: #{tpu_custom_call.1} parent=1 // pred_check_branch
      %480 = sbr.rel (0) target = $region33
    $region32: #{tpu_custom_call.1} parent=1 // pred_region
      %s482 = ssub.s32 2048, 2048
      %483 = vsyncadd [#allocation10], %s482
      %s484 = sshll.u32 [#allocation9], 4
      %s485 = int_to_ptr.vmem [resolvable:$true] %s484
      %490 = dma.vmem_to_hbm [thread:$0]  %s485, 2048, %s4, [#allocation10], 128, 128, 8
    $region33: #{tpu_custom_call.1} parent=1 // pred_fallthru
      _
    // Predicated region
    $region34: #{tpu_custom_call.1} parent=1 // pred_check
      _
    $region35: #{tpu_custom_call.1} parent=1 // pred_check_branch
      %492 = sbr.rel (0) target = $region37
    $region36: #{tpu_custom_call.1} parent=1 // pred_region
      %493 = dma.done [#allocation4], 2048
    $region37: #{tpu_custom_call.1} parent=1 // pred_fallthru
      _
    // Predicated region
    $region38: #{tpu_custom_call.1} parent=1 // pred_check
      _
    $region39: #{tpu_custom_call.1} parent=1 // pred_check_branch
      %495 = sbr.rel (0) target = $region41
    $region40: #{tpu_custom_call.1} parent=1 // pred_region
      %496 = dma.done [#allocation10], 2048
    $region41: #{tpu_custom_call.1} parent=1 // pred_fallthru
      _
    %497 = vsyncpa [#allocation3], 1
    %498 = vsyncpa [#allocation6], 1
    %499 = vsyncpa [#allocation4], 1
    %500 = vsyncpa [#allocation10], 1

</llo_original>
